<compile_context>
chip_gen: v5e
topology: v5e:2x2
jax: 0.10.0
libtpu: 0.0.40
codegen_flags: <defaults>
</compile_context>

<pallas_src>
import functools
import math

import jax
import jax.numpy as jnp
from jax.experimental import pallas as pl
from jax.experimental.pallas import tpu as pltpu


def _round_up(n, m):
    return (n + m - 1) // m * m


# ---------------------------------------------------------------------------
# Fused Pallas kernel: masks + mask-multiply + dnn0/dnn1 for all four logits
# ---------------------------------------------------------------------------
def _fused_maskdnn_kernel(embed_ref, mws_ref, mwi_ref, mwj_ref, expand_ref,
                          w1a_ref, b1a_ref, w2a_ref, b2a_ref, w3a_ref, b3a_ref,
                          w1b_ref, b1b_ref, w2b_ref, b2b_ref, w3b_ref, b3b_ref,
                          out_ref, *, temp, thre, scaling, matmul_dtype):
    f32 = jnp.float32
    tb = out_ref.shape[0]                      # rows in this batch tile

    def sigmoid(v):
        # numerically stable sigmoid via EUP tanh (EUP slot, ~free vs VALU)
        return 0.5 * jnp.tanh(0.5 * v) + 0.5

    # --- per-field masks, lane-dense (TB, F_pad), f32 elementwise ----------
    mask_s = scaling * sigmoid(temp * mws_ref[...])
    mask_i = scaling * sigmoid(temp * mwi_ref[...])
    mask_j = scaling * sigmoid(temp * mwj_ref[...])
    gate = mask_s > thre                        # == sign(relu(mask_s - thre))
    mask1 = jnp.where(gate, mask_s, mask_i)
    mask2 = jnp.where(gate, mask_s, mask_j)

    # Expand per-field masks (TB, F_pad) -> (TB, F*D) with ONE tiny constant
    # 0/1 matmul by stacking the three masks along the sublane axis.  Padded
    # fields hit all-zero rows of E and contribute nothing.
    masks = jnp.concatenate([mask1, mask2, mask_s], axis=0)        # (3TB, F_pad)
    exp = jnp.dot(masks, expand_ref[...], preferred_element_type=f32)
    m1e = exp[:tb]
    m2e = exp[tb:2 * tb]
    mse = exp[2 * tb:]

    # --- masked inputs, batched per shared-weight MLP -----------------------
    x = embed_ref[...]                          # (TB, F*D) f32
    xs = x * mse                                # shared by dnn0 & dnn1
    xa = jnp.concatenate([x * m1e, xs], axis=0).astype(matmul_dtype)  # (2TB, F*D)
    xb = jnp.concatenate([x * m2e, xs], axis=0).astype(matmul_dtype)

    def mlp(z, w1, b1, w2, b2, w3t, b3):
        h = jnp.dot(z, w1[...], preferred_element_type=f32) + b1[...]
        h = jnp.maximum(h, 0.0)
        h = jnp.dot(h.astype(matmul_dtype), w2[...],
                    preferred_element_type=f32) + b2[...]
        h = jnp.maximum(h, 0.0)
        # final Linear(h2 -> 1): VPU multiply + lane reduction (no N=1 matmul)
        return jnp.sum(h * w3t[...], axis=-1, keepdims=True) + b3[...]

    la = mlp(xa, w1a_ref, b1a_ref, w2a_ref, b2a_ref, w3a_ref, b3a_ref)  # (2TB,1)
    lb = mlp(xb, w1b_ref, b1b_ref, w2b_ref, b2b_ref, w3b_ref, b3b_ref)  # (2TB,1)

    # single (TB, 4) output block: [logit0, logit1, logit0s, logit1s]
    out_ref[:, 0:1] = la[:tb]
    out_ref[:, 1:2] = lb[:tb]
    out_ref[:, 2:3] = la[tb:]
    out_ref[:, 3:4] = lb[tb:]
    # TODO(synk): BatchNorm1d (use_bn=True) and training-mode dropout are not
    # modeled; this is the eval-mode forward with use_bn=False, dropout=0.


# ---------------------------------------------------------------------------
# MaskDNN forward (glue: gathers + padding, hot path in one pallas_call)
# ---------------------------------------------------------------------------
def mask_dnn_forward(x_idx, params, temp, thre, scaling, *,
                     block_b=256, matmul_dtype=jnp.float32):
    """Returns (logit0, logit1, logit0s, logit1s), each (B, 1) float32."""
    emb_tbl = params["embedding"]                       # (feat_num, D)
    feat_num, latent_dim = emb_tbl.shape
    B, field_num = x_idx.shape
    dnn_dim = field_num * latent_dim

    # --- data-dependent gathers (plain-JAX glue) ---------------------------
    embed = jnp.take(emb_tbl, x_idx, axis=0).reshape(B, dnn_dim)     # (B, F*D)
    mws = jnp.take(params["mask_weight_s"][:, 0], x_idx, axis=0)     # (B, F)
    mwi = jnp.take(params["mask_weight_i"][:, 0], x_idx, axis=0)
    mwj = jnp.take(params["mask_weight_j"][:, 0], x_idx, axis=0)

    # --- pad batch to a tile multiple, fields to a sublane multiple --------
    tb = _round_up(min(block_b, _round_up(B, 8)), 8)   # VMEM-safe batch tile
    b_pad = _round_up(B, tb)
    f_pad = _round_up(field_num, 8)
    embed = jnp.pad(embed, ((0, b_pad - B), (0, 0)))
    pad2 = ((0, b_pad - B), (0, f_pad - field_num))
    mws = jnp.pad(mws, pad2)
    mwi = jnp.pad(mwi, pad2)
    mwj = jnp.pad(mwj, pad2)

    # constant 0/1 per-field -> per-feature expansion matrix (F_pad, F*D)
    expand = jnp.repeat(jnp.eye(f_pad, field_num, dtype=jnp.float32),
                        latent_dim, axis=1)

    def prep_dnn(p):
        w1, b1, w2, b2, w3, b3 = p
        return (w1.astype(matmul_dtype), b1.astype(jnp.float32),
                w2.astype(matmul_dtype), b2.astype(jnp.float32),
                jnp.reshape(w3, (1, -1)).astype(jnp.float32),   # (1, H2)
                jnp.reshape(b3, (1, 1)).astype(jnp.float32))

    dnn0 = prep_dnn(params["dnn0"])
    dnn1 = prep_dnn(params["dnn1"])

    row_spec = lambda cols: pl.BlockSpec((tb, cols), lambda i: (i, 0))
    full_spec = lambda arr: pl.BlockSpec(arr.shape, lambda i: (0, 0))
    weight_specs = [full_spec(t) for t in (*dnn0, *dnn1)]

    kernel = functools.partial(
        _fused_maskdnn_kernel, temp=float(temp), thre=float(thre),
        scaling=float(scaling), matmul_dtype=matmul_dtype)

    out = pl.pallas_call(
        kernel,
        out_shape=jax.ShapeDtypeStruct((b_pad, 4), jnp.float32),
        grid=(b_pad // tb,),
        in_specs=[row_spec(dnn_dim), row_spec(f_pad), row_spec(f_pad),
                  row_spec(f_pad), full_spec(expand)] + weight_specs,
        out_specs=pl.BlockSpec((tb, 4), lambda i: (i, 0)),
        compiler_params=pltpu.CompilerParams(
            dimension_semantics=("parallel",)),
    )(embed, mws, mwi, mwj, expand, *dnn0, *dnn1)

    logits = out[:B]
    return (logits[:, 0:1], logits[:, 1:2], logits[:, 2:3], logits[:, 3:4])


# ---------------------------------------------------------------------------
# Pure-JAX reference (semantics of the PyTorch module, eval mode)
# ---------------------------------------------------------------------------
def _ref_mlp(x, p):
    w1, b1, w2, b2, w3, b3 = p
    h = jnp.maximum(x @ w1 + b1, 0.0)
    h = jnp.maximum(h @ w2 + b2, 0.0)
    return h @ w3 + b3


def ref_forward(x_idx, params, temp, thre, scaling):
    embed = jnp.take(params["embedding"], x_idx, axis=0)         # (B, F, D)
    mws = jnp.take(params["mask_weight_s"], x_idx, axis=0)       # (B, F, 1)
    mwi = jnp.take(params["mask_weight_i"], x_idx, axis=0)
    mwj = jnp.take(params["mask_weight_j"], x_idx, axis=0)
    mask_s = scaling * jax.nn.sigmoid(temp * mws)
    mask_i = scaling * jax.nn.sigmoid(temp * mwi)
    mask_j = scaling * jax.nn.sigmoid(temp * mwj)
    g_s = jnp.sign(jnp.maximum(mask_s - thre, 0.0))
    mask1 = mask_s * g_s + mask_i * (1.0 - g_s)
    mask2 = mask_s * g_s + mask_j * (1.0 - g_s)
    B = x_idx.shape[0]
    x_s = (embed * mask_s).reshape(B, -1)
    x_0 = (embed * mask1).reshape(B, -1)
    x_1 = (embed * mask2).reshape(B, -1)
    return (_ref_mlp(x_0, params["dnn0"]), _ref_mlp(x_1, params["dnn1"]),
            _ref_mlp(x_s, params["dnn0"]), _ref_mlp(x_s, params["dnn1"]))


# ---------------------------------------------------------------------------
# Deterministic parameter construction
# ---------------------------------------------------------------------------
def make_params(key, feat_num, field_num, latent_dim, mlp_dims):
    h1, h2 = mlp_dims
    dnn_dim = field_num * latent_dim
    keys = jax.random.split(key, 16)

    def linear(kw, kb, din, dout):
        w = jax.random.normal(kw, (din, dout), jnp.float32) * (din ** -0.5)
        b = jax.random.normal(kb, (1, dout), jnp.float32) * 0.01
        return w, b

    dnn0 = (*linear(keys[0], keys[1], dnn_dim, h1),
            *linear(keys[2], keys[3], h1, h2),
            *linear(keys[4], keys[5], h2, 1))
    dnn1 = (*linear(keys[6], keys[7], dnn_dim, h1),
            *linear(keys[8], keys[9], h1, h2),
            *linear(keys[10], keys[11], h2, 1))

    embedding = jax.random.normal(keys[12], (feat_num, latent_dim),
                                  jnp.float32) * 0.1
    # Module __init__ sets mask weights to a constant; use small random values
    # so both branches of the threshold gate are exercised.
    return {
        "embedding": embedding,
        "mask_weight_i": jax.random.normal(keys[13], (feat_num, 1), jnp.float32) * 0.5,
        "mask_weight_s": jax.random.normal(keys[14], (feat_num, 1), jnp.float32) * 0.5,
        "mask_weight_j": jax.random.normal(keys[15], (feat_num, 1), jnp.float32) * 0.5,
        "dnn0": dnn0,
        "dnn1": dnn1,
    }


if __name__ == "__main__":
    # Small shapes consistent with the module's forward.
    B = 13                 # deliberately not a tile multiple (exercises padding)
    feat_num = 24
    field_num = 4
    latent_dim = 16
    mlp_dims = (32, 32)

    # Hyperparameters (opt-dict equivalents).
    mask_weight_init_value = 0.0
    mask_scaling = 1.0
    init_thre = 1.0
    temp = 1.0
    thre = float(init_thre * mask_scaling)
    # scaling = mask_scaling * 1 / sigmoid(mask_weight_init_value)
    scaling = float(mask_scaling * (1.0 + math.exp(-mask_weight_init_value)))

    key = jax.random.PRNGKey(0)
    kp, kx = jax.random.split(key)
    params = make_params(kp, feat_num, field_num, latent_dim, mlp_dims)
    x_idx = jax.random.randint(kx, (B, field_num), 0, feat_num, dtype=jnp.int32)

    # f32 path (block_b=8 so the batch-tiled grid has >1 step at this size)
    outs = mask_dnn_forward(x_idx, params, temp, thre, scaling, block_b=8)
    outs = jax.block_until_ready(outs)

    refs = ref_forward(x_idx, params, temp, thre, scaling)
    for o, r in zip(outs, refs):
        assert o.shape == (B, 1)
        assert jnp.allclose(o, r, atol=2e-4, rtol=2e-4), \
            float(jnp.max(jnp.abs(o - r)))

    # bf16 matmul-operand path (v6e/v7x perf option); elementwise stays f32.
    outs_bf16 = jax.block_until_ready(
        mask_dnn_forward(x_idx, params, temp, thre, scaling,
                         block_b=8, matmul_dtype=jnp.bfloat16))
    for o, r in zip(outs_bf16, refs):
        assert o.shape == (B, 1)
        assert jnp.allclose(o, r, atol=5e-2, rtol=5e-2), \
            float(jnp.max(jnp.abs(o - r)))

    print("KERNEL_OK")
</pallas_src>

<mosaic_0001>
module attributes {stable_mosaic.version = 11 : i64} {
  func.func @_fused_maskdnn_kernel(%arg0: i32, %arg1: memref<8x64xf32, #tpu.memory_space<vmem>>, %arg2: memref<8x8xf32, #tpu.memory_space<vmem>>, %arg3: memref<8x8xf32, #tpu.memory_space<vmem>>, %arg4: memref<8x8xf32, #tpu.memory_space<vmem>>, %arg5: memref<8x64xf32, #tpu.memory_space<vmem>>, %arg6: memref<64x32xf32, #tpu.memory_space<vmem>>, %arg7: memref<1x32xf32, #tpu.memory_space<vmem>>, %arg8: memref<32x32xf32, #tpu.memory_space<vmem>>, %arg9: memref<1x32xf32, #tpu.memory_space<vmem>>, %arg10: memref<1x32xf32, #tpu.memory_space<vmem>>, %arg11: memref<1x1xf32, #tpu.memory_space<vmem>>, %arg12: memref<64x32xf32, #tpu.memory_space<vmem>>, %arg13: memref<1x32xf32, #tpu.memory_space<vmem>>, %arg14: memref<32x32xf32, #tpu.memory_space<vmem>>, %arg15: memref<1x32xf32, #tpu.memory_space<vmem>>, %arg16: memref<1x32xf32, #tpu.memory_space<vmem>>, %arg17: memref<1x1xf32, #tpu.memory_space<vmem>>, %arg18: memref<8x4xf32, #tpu.memory_space<vmem>>) attributes {dimension_semantics = [#tpu.dimension_semantics<parallel>], iteration_bounds = array<i64: 2>, scalar_prefetch = 0 : i64, scratch_operands = 0 : i64, tpu.core_type = #tpu.core_type<tc>, window_params = [{transform_indices = @transform_0, window_bounds = array<i64: 8, 64>}, {transform_indices = @transform_1, window_bounds = array<i64: 8, 8>}, {transform_indices = @transform_2, window_bounds = array<i64: 8, 8>}, {transform_indices = @transform_3, window_bounds = array<i64: 8, 8>}, {pipeline_mode = #tpu.pipeline_mode<synchronous>, transform_indices = @transform_4, window_bounds = array<i64: 8, 64>}, {pipeline_mode = #tpu.pipeline_mode<synchronous>, transform_indices = @transform_5, window_bounds = array<i64: 64, 32>}, {pipeline_mode = #tpu.pipeline_mode<synchronous>, transform_indices = @transform_6, window_bounds = array<i64: 1, 32>}, {pipeline_mode = #tpu.pipeline_mode<synchronous>, transform_indices = @transform_7, window_bounds = array<i64: 32, 32>}, {pipeline_mode = #tpu.pipeline_mode<synchronous>, transform_indices = @transform_8, window_bounds = array<i64: 1, 32>}, {pipeline_mode = #tpu.pipeline_mode<synchronous>, transform_indices = @transform_9, window_bounds = array<i64: 1, 32>}, {pipeline_mode = #tpu.pipeline_mode<synchronous>, transform_indices = @transform_10, window_bounds = array<i64: 1, 1>}, {pipeline_mode = #tpu.pipeline_mode<synchronous>, transform_indices = @transform_11, window_bounds = array<i64: 64, 32>}, {pipeline_mode = #tpu.pipeline_mode<synchronous>, transform_indices = @transform_12, window_bounds = array<i64: 1, 32>}, {pipeline_mode = #tpu.pipeline_mode<synchronous>, transform_indices = @transform_13, window_bounds = array<i64: 32, 32>}, {pipeline_mode = #tpu.pipeline_mode<synchronous>, transform_indices = @transform_14, window_bounds = array<i64: 1, 32>}, {pipeline_mode = #tpu.pipeline_mode<synchronous>, transform_indices = @transform_15, window_bounds = array<i64: 1, 32>}, {pipeline_mode = #tpu.pipeline_mode<synchronous>, transform_indices = @transform_16, window_bounds = array<i64: 1, 1>}, {transform_indices = @transform_17, window_bounds = array<i64: 8, 4>}]} {
    %c0 = arith.constant 0 : index
    %c0_0 = arith.constant 0 : index
    %0 = vector.load %arg2[%c0, %c0_0] : memref<8x8xf32, #tpu.memory_space<vmem>>, vector<8x8xf32>
    %cst = arith.constant 1.000000e+00 : f32
    %1 = vector.broadcast %cst : f32 to vector<8x8xf32>
    %2 = arith.mulf %1, %0 : vector<8x8xf32>
    %cst_1 = arith.constant 5.000000e-01 : f32
    %3 = vector.broadcast %cst_1 : f32 to vector<8x8xf32>
    %4 = arith.mulf %3, %2 : vector<8x8xf32>
    %5 = math.tanh %4 : vector<8x8xf32>
    %cst_2 = arith.constant 5.000000e-01 : f32
    %6 = vector.broadcast %cst_2 : f32 to vector<8x8xf32>
    %7 = arith.mulf %6, %5 : vector<8x8xf32>
    %cst_3 = arith.constant 5.000000e-01 : f32
    %8 = vector.broadcast %cst_3 : f32 to vector<8x8xf32>
    %9 = arith.addf %7, %8 : vector<8x8xf32>
    %cst_4 = arith.constant 2.000000e+00 : f32
    %10 = vector.broadcast %cst_4 : f32 to vector<8x8xf32>
    %11 = arith.mulf %10, %9 : vector<8x8xf32>
    %c0_5 = arith.constant 0 : index
    %c0_6 = arith.constant 0 : index
    %12 = vector.load %arg3[%c0_5, %c0_6] : memref<8x8xf32, #tpu.memory_space<vmem>>, vector<8x8xf32>
    %cst_7 = arith.constant 1.000000e+00 : f32
    %13 = vector.broadcast %cst_7 : f32 to vector<8x8xf32>
    %14 = arith.mulf %13, %12 : vector<8x8xf32>
    %cst_8 = arith.constant 5.000000e-01 : f32
    %15 = vector.broadcast %cst_8 : f32 to vector<8x8xf32>
    %16 = arith.mulf %15, %14 : vector<8x8xf32>
    %17 = math.tanh %16 : vector<8x8xf32>
    %cst_9 = arith.constant 5.000000e-01 : f32
    %18 = vector.broadcast %cst_9 : f32 to vector<8x8xf32>
    %19 = arith.mulf %18, %17 : vector<8x8xf32>
    %cst_10 = arith.constant 5.000000e-01 : f32
    %20 = vector.broadcast %cst_10 : f32 to vector<8x8xf32>
    %21 = arith.addf %19, %20 : vector<8x8xf32>
    %cst_11 = arith.constant 2.000000e+00 : f32
    %22 = vector.broadcast %cst_11 : f32 to vector<8x8xf32>
    %23 = arith.mulf %22, %21 : vector<8x8xf32>
    %c0_12 = arith.constant 0 : index
    %c0_13 = arith.constant 0 : index
    %24 = vector.load %arg4[%c0_12, %c0_13] : memref<8x8xf32, #tpu.memory_space<vmem>>, vector<8x8xf32>
    %cst_14 = arith.constant 1.000000e+00 : f32
    %25 = vector.broadcast %cst_14 : f32 to vector<8x8xf32>
    %26 = arith.mulf %25, %24 : vector<8x8xf32>
    %cst_15 = arith.constant 5.000000e-01 : f32
    %27 = vector.broadcast %cst_15 : f32 to vector<8x8xf32>
    %28 = arith.mulf %27, %26 : vector<8x8xf32>
    %29 = math.tanh %28 : vector<8x8xf32>
    %cst_16 = arith.constant 5.000000e-01 : f32
    %30 = vector.broadcast %cst_16 : f32 to vector<8x8xf32>
    %31 = arith.mulf %30, %29 : vector<8x8xf32>
    %cst_17 = arith.constant 5.000000e-01 : f32
    %32 = vector.broadcast %cst_17 : f32 to vector<8x8xf32>
    %33 = arith.addf %31, %32 : vector<8x8xf32>
    %cst_18 = arith.constant 2.000000e+00 : f32
    %34 = vector.broadcast %cst_18 : f32 to vector<8x8xf32>
    %35 = arith.mulf %34, %33 : vector<8x8xf32>
    %cst_19 = arith.constant 1.000000e+00 : f32
    %36 = vector.broadcast %cst_19 : f32 to vector<8x8xf32>
    %37 = arith.cmpf ogt, %11, %36 : vector<8x8xf32>
    %38 = arith.select %37, %11, %23 : vector<8x8xi1>, vector<8x8xf32>
    %39 = arith.select %37, %11, %35 : vector<8x8xi1>, vector<8x8xf32>
    %40 = tpu.concatenate %38, %39, %11 in 0 : vector<8x8xf32>, vector<8x8xf32>, vector<8x8xf32> -> vector<24x8xf32>
    %c0_20 = arith.constant 0 : index
    %c0_21 = arith.constant 0 : index
    %41 = vector.load %arg5[%c0_20, %c0_21] : memref<8x64xf32, #tpu.memory_space<vmem>>, vector<8x64xf32>
    %cst_22 = arith.constant dense<0.000000e+00> : vector<24x64xf32>
    %42 = tpu.matmul %40, %41, %cst_22 {dimension_numbers = #tpu.dot_dimension_numbers<[1], [0], [0], [1], [0, 0, 1, 1], [], []>} : vector<24x8xf32>, vector<8x64xf32>, vector<24x64xf32> -> vector<24x64xf32>
    %43 = vector.extract_strided_slice %42 {offsets = [0, 0], sizes = [8, 64], strides = [1, 1]} : vector<24x64xf32> to vector<8x64xf32>
    %44 = vector.extract_strided_slice %42 {offsets = [8, 0], sizes = [8, 64], strides = [1, 1]} : vector<24x64xf32> to vector<8x64xf32>
    %45 = vector.extract_strided_slice %42 {offsets = [16, 0], sizes = [8, 64], strides = [1, 1]} : vector<24x64xf32> to vector<8x64xf32>
    %c0_23 = arith.constant 0 : index
    %c0_24 = arith.constant 0 : index
    %46 = vector.load %arg1[%c0_23, %c0_24] : memref<8x64xf32, #tpu.memory_space<vmem>>, vector<8x64xf32>
    %47 = arith.mulf %46, %45 : vector<8x64xf32>
    %48 = arith.mulf %46, %43 : vector<8x64xf32>
    %49 = tpu.concatenate %48, %47 in 0 : vector<8x64xf32>, vector<8x64xf32> -> vector<16x64xf32>
    %50 = arith.mulf %46, %44 : vector<8x64xf32>
    %51 = tpu.concatenate %50, %47 in 0 : vector<8x64xf32>, vector<8x64xf32> -> vector<16x64xf32>
    %c0_25 = arith.constant 0 : index
    %c0_26 = arith.constant 0 : index
    %52 = vector.load %arg6[%c0_25, %c0_26] : memref<64x32xf32, #tpu.memory_space<vmem>>, vector<64x32xf32>
    %cst_27 = arith.constant dense<0.000000e+00> : vector<16x32xf32>
    %53 = tpu.matmul %49, %52, %cst_27 {dimension_numbers = #tpu.dot_dimension_numbers<[1], [0], [0], [1], [0, 0, 1, 1], [], []>} : vector<16x64xf32>, vector<64x32xf32>, vector<16x32xf32> -> vector<16x32xf32>
    %c0_28 = arith.constant 0 : index
    %c0_29 = arith.constant 0 : index
    %54 = vector.load %arg7[%c0_28, %c0_29] : memref<1x32xf32, #tpu.memory_space<vmem>>, vector<1x32xf32>
    %55 = vector.broadcast %54 : vector<1x32xf32> to vector<16x32xf32>
    %56 = arith.addf %53, %55 : vector<16x32xf32>
    %cst_30 = arith.constant 0.000000e+00 : f32
    %57 = vector.broadcast %cst_30 : f32 to vector<16x32xf32>
    %58 = arith.maximumf %56, %57 : vector<16x32xf32>
    %c0_31 = arith.constant 0 : index
    %c0_32 = arith.constant 0 : index
    %59 = vector.load %arg8[%c0_31, %c0_32] : memref<32x32xf32, #tpu.memory_space<vmem>>, vector<32x32xf32>
    %cst_33 = arith.constant dense<0.000000e+00> : vector<16x32xf32>
    %60 = tpu.matmul %58, %59, %cst_33 {dimension_numbers = #tpu.dot_dimension_numbers<[1], [0], [0], [1], [0, 0, 1, 1], [], []>} : vector<16x32xf32>, vector<32x32xf32>, vector<16x32xf32> -> vector<16x32xf32>
    %c0_34 = arith.constant 0 : index
    %c0_35 = arith.constant 0 : index
    %61 = vector.load %arg9[%c0_34, %c0_35] : memref<1x32xf32, #tpu.memory_space<vmem>>, vector<1x32xf32>
    %62 = vector.broadcast %61 : vector<1x32xf32> to vector<16x32xf32>
    %63 = arith.addf %60, %62 : vector<16x32xf32>
    %cst_36 = arith.constant 0.000000e+00 : f32
    %64 = vector.broadcast %cst_36 : f32 to vector<16x32xf32>
    %65 = arith.maximumf %63, %64 : vector<16x32xf32>
    %c0_37 = arith.constant 0 : index
    %c0_38 = arith.constant 0 : index
    %66 = vector.load %arg10[%c0_37, %c0_38] : memref<1x32xf32, #tpu.memory_space<vmem>>, vector<1x32xf32>
    %67 = vector.broadcast %66 : vector<1x32xf32> to vector<16x32xf32>
    %68 = arith.mulf %65, %67 : vector<16x32xf32>
    %cst_39 = arith.constant dense<0.000000e+00> : vector<16xf32>
    %69 = vector.multi_reduction <add>, %68, %cst_39 [1] : vector<16x32xf32> to vector<16xf32>
    %70 = vector.shape_cast %69 : vector<16xf32> to vector<16x1xf32>
    %c0_40 = arith.constant 0 : index
    %c0_41 = arith.constant 0 : index
    %71 = vector.load %arg11[%c0_40, %c0_41] : memref<1x1xf32, #tpu.memory_space<vmem>>, vector<1x1xf32>
    %72 = vector.broadcast %71 : vector<1x1xf32> to vector<16x1xf32>
    %73 = arith.addf %70, %72 : vector<16x1xf32>
    %c0_42 = arith.constant 0 : index
    %c0_43 = arith.constant 0 : index
    %74 = vector.load %arg12[%c0_42, %c0_43] : memref<64x32xf32, #tpu.memory_space<vmem>>, vector<64x32xf32>
    %cst_44 = arith.constant dense<0.000000e+00> : vector<16x32xf32>
    %75 = tpu.matmul %51, %74, %cst_44 {dimension_numbers = #tpu.dot_dimension_numbers<[1], [0], [0], [1], [0, 0, 1, 1], [], []>} : vector<16x64xf32>, vector<64x32xf32>, vector<16x32xf32> -> vector<16x32xf32>
    %c0_45 = arith.constant 0 : index
    %c0_46 = arith.constant 0 : index
    %76 = vector.load %arg13[%c0_45, %c0_46] : memref<1x32xf32, #tpu.memory_space<vmem>>, vector<1x32xf32>
    %77 = vector.broadcast %76 : vector<1x32xf32> to vector<16x32xf32>
    %78 = arith.addf %75, %77 : vector<16x32xf32>
    %cst_47 = arith.constant 0.000000e+00 : f32
    %79 = vector.broadcast %cst_47 : f32 to vector<16x32xf32>
    %80 = arith.maximumf %78, %79 : vector<16x32xf32>
    %c0_48 = arith.constant 0 : index
    %c0_49 = arith.constant 0 : index
    %81 = vector.load %arg14[%c0_48, %c0_49] : memref<32x32xf32, #tpu.memory_space<vmem>>, vector<32x32xf32>
    %cst_50 = arith.constant dense<0.000000e+00> : vector<16x32xf32>
    %82 = tpu.matmul %80, %81, %cst_50 {dimension_numbers = #tpu.dot_dimension_numbers<[1], [0], [0], [1], [0, 0, 1, 1], [], []>} : vector<16x32xf32>, vector<32x32xf32>, vector<16x32xf32> -> vector<16x32xf32>
    %c0_51 = arith.constant 0 : index
    %c0_52 = arith.constant 0 : index
    %83 = vector.load %arg15[%c0_51, %c0_52] : memref<1x32xf32, #tpu.memory_space<vmem>>, vector<1x32xf32>
    %84 = vector.broadcast %83 : vector<1x32xf32> to vector<16x32xf32>
    %85 = arith.addf %82, %84 : vector<16x32xf32>
    %cst_53 = arith.constant 0.000000e+00 : f32
    %86 = vector.broadcast %cst_53 : f32 to vector<16x32xf32>
    %87 = arith.maximumf %85, %86 : vector<16x32xf32>
    %c0_54 = arith.constant 0 : index
    %c0_55 = arith.constant 0 : index
    %88 = vector.load %arg16[%c0_54, %c0_55] : memref<1x32xf32, #tpu.memory_space<vmem>>, vector<1x32xf32>
    %89 = vector.broadcast %88 : vector<1x32xf32> to vector<16x32xf32>
    %90 = arith.mulf %87, %89 : vector<16x32xf32>
    %cst_56 = arith.constant dense<0.000000e+00> : vector<16xf32>
    %91 = vector.multi_reduction <add>, %90, %cst_56 [1] : vector<16x32xf32> to vector<16xf32>
    %92 = vector.shape_cast %91 : vector<16xf32> to vector<16x1xf32>
    %c0_57 = arith.constant 0 : index
    %c0_58 = arith.constant 0 : index
    %93 = vector.load %arg17[%c0_57, %c0_58] : memref<1x1xf32, #tpu.memory_space<vmem>>, vector<1x1xf32>
    %94 = vector.broadcast %93 : vector<1x1xf32> to vector<16x1xf32>
    %95 = arith.addf %92, %94 : vector<16x1xf32>
    %96 = vector.extract_strided_slice %73 {offsets = [0, 0], sizes = [8, 1], strides = [1, 1]} : vector<16x1xf32> to vector<8x1xf32>
    %c0_59 = arith.constant 0 : index
    %c0_60 = arith.constant 0 : index
    %97 = vector.load %arg18[%c0_59, %c0_60] : memref<8x4xf32, #tpu.memory_space<vmem>>, vector<8x1xf32>
    tpu.vector_store %arg18[%c0_59, %c0_60], %96 {strides = array<i32>} : memref<8x4xf32, #tpu.memory_space<vmem>>, vector<8x1xf32>,
    %98 = vector.extract_strided_slice %95 {offsets = [0, 0], sizes = [8, 1], strides = [1, 1]} : vector<16x1xf32> to vector<8x1xf32>
    %c0_61 = arith.constant 0 : index
    %c1 = arith.constant 1 : index
    %99 = vector.load %arg18[%c0_61, %c1] : memref<8x4xf32, #tpu.memory_space<vmem>>, vector<8x1xf32>
    tpu.vector_store %arg18[%c0_61, %c1], %98 {strides = array<i32>} : memref<8x4xf32, #tpu.memory_space<vmem>>, vector<8x1xf32>,
    %100 = vector.extract_strided_slice %73 {offsets = [8, 0], sizes = [8, 1], strides = [1, 1]} : vector<16x1xf32> to vector<8x1xf32>
    %c0_62 = arith.constant 0 : index
    %c2 = arith.constant 2 : index
    %101 = vector.load %arg18[%c0_62, %c2] : memref<8x4xf32, #tpu.memory_space<vmem>>, vector<8x1xf32>
    tpu.vector_store %arg18[%c0_62, %c2], %100 {strides = array<i32>} : memref<8x4xf32, #tpu.memory_space<vmem>>, vector<8x1xf32>,
    %102 = vector.extract_strided_slice %95 {offsets = [8, 0], sizes = [8, 1], strides = [1, 1]} : vector<16x1xf32> to vector<8x1xf32>
    %c0_63 = arith.constant 0 : index
    %c3 = arith.constant 3 : index
    %103 = vector.load %arg18[%c0_63, %c3] : memref<8x4xf32, #tpu.memory_space<vmem>>, vector<8x1xf32>
    tpu.vector_store %arg18[%c0_63, %c3], %102 {strides = array<i32>} : memref<8x4xf32, #tpu.memory_space<vmem>>, vector<8x1xf32>,
    return
  }
  func.func @transform_0(%arg0: i32) -> (i32, i32) {
    %c0_i32 = arith.constant 0 : i32
    %c0_i32_0 = arith.constant 0 : i32
    return %arg0, %c0_i32 : i32, i32
  }
  func.func @transform_1(%arg0: i32) -> (i32, i32) {
    %c0_i32 = arith.constant 0 : i32
    %c0_i32_0 = arith.constant 0 : i32
    return %arg0, %c0_i32 : i32, i32
  }
  func.func @transform_2(%arg0: i32) -> (i32, i32) {
    %c0_i32 = arith.constant 0 : i32
    %c0_i32_0 = arith.constant 0 : i32
    return %arg0, %c0_i32 : i32, i32
  }
  func.func @transform_3(%arg0: i32) -> (i32, i32) {
    %c0_i32 = arith.constant 0 : i32
    %c0_i32_0 = arith.constant 0 : i32
    return %arg0, %c0_i32 : i32, i32
  }
  func.func @transform_4(%arg0: i32) -> (i32, i32) {
    %c0_i32 = arith.constant 0 : i32
    %c0_i32_0 = arith.constant 0 : i32
    %c0_i32_1 = arith.constant 0 : i32
    return %c0_i32, %c0_i32_0 : i32, i32
  }
  func.func @transform_5(%arg0: i32) -> (i32, i32) {
    %c0_i32 = arith.constant 0 : i32
    %c0_i32_0 = arith.constant 0 : i32
    %c0_i32_1 = arith.constant 0 : i32
    return %c0_i32, %c0_i32_0 : i32, i32
  }
  func.func @transform_6(%arg0: i32) -> (i32, i32) {
    %c0_i32 = arith.constant 0 : i32
    %c0_i32_0 = arith.constant 0 : i32
    %c0_i32_1 = arith.constant 0 : i32
    return %c0_i32, %c0_i32_0 : i32, i32
  }
  func.func @transform_7(%arg0: i32) -> (i32, i32) {
    %c0_i32 = arith.constant 0 : i32
    %c0_i32_0 = arith.constant 0 : i32
    %c0_i32_1 = arith.constant 0 : i32
    return %c0_i32, %c0_i32_0 : i32, i32
  }
  func.func @transform_8(%arg0: i32) -> (i32, i32) {
    %c0_i32 = arith.constant 0 : i32
    %c0_i32_0 = arith.constant 0 : i32
    %c0_i32_1 = arith.constant 0 : i32
    return %c0_i32, %c0_i32_0 : i32, i32
  }
  func.func @transform_9(%arg0: i32) -> (i32, i32) {
    %c0_i32 = arith.constant 0 : i32
    %c0_i32_0 = arith.constant 0 : i32
    %c0_i32_1 = arith.constant 0 : i32
    return %c0_i32, %c0_i32_0 : i32, i32
  }
  func.func @transform_10(%arg0: i32) -> (i32, i32) {
    %c0_i32 = arith.constant 0 : i32
    %c0_i32_0 = arith.constant 0 : i32
    %c0_i32_1 = arith.constant 0 : i32
    return %c0_i32, %c0_i32_0 : i32, i32
  }
  func.func @transform_11(%arg0: i32) -> (i32, i32) {
    %c0_i32 = arith.constant 0 : i32
    %c0_i32_0 = arith.constant 0 : i32
    %c0_i32_1 = arith.constant 0 : i32
    return %c0_i32, %c0_i32_0 : i32, i32
  }
  func.func @transform_12(%arg0: i32) -> (i32, i32) {
    %c0_i32 = arith.constant 0 : i32
    %c0_i32_0 = arith.constant 0 : i32
    %c0_i32_1 = arith.constant 0 : i32
    return %c0_i32, %c0_i32_0 : i32, i32
  }
  func.func @transform_13(%arg0: i32) -> (i32, i32) {
    %c0_i32 = arith.constant 0 : i32
    %c0_i32_0 = arith.constant 0 : i32
    %c0_i32_1 = arith.constant 0 : i32
    return %c0_i32, %c0_i32_0 : i32, i32
  }
  func.func @transform_14(%arg0: i32) -> (i32, i32) {
    %c0_i32 = arith.constant 0 : i32
    %c0_i32_0 = arith.constant 0 : i32
    %c0_i32_1 = arith.constant 0 : i32
    return %c0_i32, %c0_i32_0 : i32, i32
  }
  func.func @transform_15(%arg0: i32) -> (i32, i32) {
    %c0_i32 = arith.constant 0 : i32
    %c0_i32_0 = arith.constant 0 : i32
    %c0_i32_1 = arith.constant 0 : i32
    return %c0_i32, %c0_i32_0 : i32, i32
  }
  func.func @transform_16(%arg0: i32) -> (i32, i32) {
    %c0_i32 = arith.constant 0 : i32
    %c0_i32_0 = arith.constant 0 : i32
    %c0_i32_1 = arith.constant 0 : i32
    return %c0_i32, %c0_i32_0 : i32, i32
  }
  func.func @transform_17(%arg0: i32) -> (i32, i32) {
    %c0_i32 = arith.constant 0 : i32
    %c0_i32_0 = arith.constant 0 : i32
    return %arg0, %c0_i32 : i32, i32
  }
}

</mosaic_0001>

<llo_original>
// kernel: tpu_custom_call.1
$region0: #{tpu_custom_call.1}
  #allocation0 [shape = 'u32[]', space=smem, size = 0x4, offset = 0x4, fixed_abs, tag = 'smem constant byte address 0x4 - core index']
  #allocation1 [shape = 'u32[72,128]{1,0:T(1,128)}', space=vmem, size = 0x9000, scoped, tag = 'internal scratch']
  #allocation2 [shape = 'f32[1,1]{1,0:T(1,128)S(1)}', space=vmem, size = 0x200, scoped, tag = 'scoped memory for tpu_custom_call.1']
  #allocation3 [shape = 'f32[1,1]{1,0:T(1,128)S(1)}', space=vmem, size = 0x200, scoped, tag = 'scoped memory for tpu_custom_call.1']
  %s0 = inlined_call_operand.vmem [shape: f32[16,64], index: 0, kind: input, shape index: {}]
  %s1 = inlined_call_operand.vmem [shape: f32[16,8], index: 1, kind: input, shape index: {}]
  %s2 = inlined_call_operand.vmem [shape: f32[16,8], index: 2, kind: input, shape index: {}]
  %s3 = inlined_call_operand.vmem [shape: f32[16,8], index: 3, kind: input, shape index: {}]
  %s4 = inlined_call_operand.vmem [shape: f32[8,64], index: 4, kind: input, shape index: {}]
  %s5 = inlined_call_operand.vmem [shape: f32[64,32], index: 5, kind: input, shape index: {}]
  %s6 = inlined_call_operand.vmem [shape: f32[1,32], index: 6, kind: input, shape index: {}]
  %s7 = inlined_call_operand.vmem [shape: f32[32,32], index: 7, kind: input, shape index: {}]
  %s8 = inlined_call_operand.vmem [shape: f32[1,32], index: 8, kind: input, shape index: {}]
  %s9 = inlined_call_operand.vmem [shape: f32[1,32], index: 9, kind: input, shape index: {}]
  %s10 = inlined_call_operand.<no memory space> [shape: f32[1,1], index: 10, kind: input, shape index: {}]
  %s11 = inlined_call_operand.vmem [shape: f32[64,32], index: 11, kind: input, shape index: {}]
  %s12 = inlined_call_operand.vmem [shape: f32[1,32], index: 12, kind: input, shape index: {}]
  %s13 = inlined_call_operand.vmem [shape: f32[32,32], index: 13, kind: input, shape index: {}]
  %s14 = inlined_call_operand.vmem [shape: f32[1,32], index: 14, kind: input, shape index: {}]
  %s15 = inlined_call_operand.vmem [shape: f32[1,32], index: 15, kind: input, shape index: {}]
  %s16 = inlined_call_operand.<no memory space> [shape: f32[1,1], index: 16, kind: input, shape index: {}]
  %s17 = inlined_call_operand.vmem [shape: f32[16,4], index: 17, kind: output, shape index: {}]
  %s18 = sld [smem:[#allocation0]]
  $region101: #{tpu_custom_call.1} parent=0
    _
  %s20 = ssub.s32 1, %s18
  %s21 = scalar_select 0, %s20, %s18
  %v22 = vstv %s10
  %23 = vst [vmem:[#allocation2] sm:$0x1] %v22
  %v24 = vstv %s16
  %25 = vst [vmem:[#allocation3] sm:$0x1] %v24
  loop: start=0, step=1, limit=4
  $region2: #{tpu_custom_call.1} parent=0 // loop_pre_header
    _
  $region3: #{tpu_custom_call.1} parent=0 // loop_header
    %s27 = sphi 0, %s31
    %p28 = scmp.ge.s32.totalorder %s27, 4
    %s37 = sphi 0, %s39
    %s40 = sphi 0, %s37
    %s41 = sphi 0, %s40
    %s57 = sphi 0, %s41
    %s63 = sphi 0, %s65
    %s66 = sphi 0, %s63
    %s67 = sphi 0, %s66
    %s83 = sphi 0, %s67
    %s89 = sphi 0, %s91
    %s92 = sphi 0, %s89
    %s93 = sphi 0, %s92
    %s109 = sphi 0, %s93
    %s115 = sphi 0, %s117
    %s118 = sphi 0, %s115
    %s119 = sphi 0, %s118
    %s135 = sphi 0, %s119
    %s139 = sphi 0, %s139
    %s141 = sphi 0, %s139
    %s142 = sphi 0, %s141
    %s156 = sphi 0, %s142
    %s160 = sphi 0, %s160
    %s162 = sphi 0, %s160
    %s163 = sphi 0, %s162
    %s177 = sphi 0, %s163
    %s181 = sphi 0, %s181
    %s183 = sphi 0, %s181
    %s184 = sphi 0, %s183
    %s198 = sphi 0, %s184
    %s202 = sphi 0, %s202
    %s204 = sphi 0, %s202
    %s205 = sphi 0, %s204
    %s219 = sphi 0, %s205
    %s223 = sphi 0, %s223
    %s225 = sphi 0, %s223
    %s226 = sphi 0, %s225
    %s240 = sphi 0, %s226
    %s244 = sphi 0, %s244
    %s246 = sphi 0, %s244
    %s247 = sphi 0, %s246
    %s261 = sphi 0, %s247
    %s265 = sphi 0, %s265
    %s267 = sphi 0, %s265
    %s268 = sphi 0, %s267
    %s282 = sphi 0, %s268
    %s286 = sphi 0, %s286
    %s288 = sphi 0, %s286
    %s289 = sphi 0, %s288
    %s303 = sphi 0, %s289
    %s307 = sphi 0, %s307
    %s309 = sphi 0, %s307
    %s310 = sphi 0, %s309
    %s324 = sphi 0, %s310
    %s328 = sphi 0, %s328
    %s330 = sphi 0, %s328
    %s331 = sphi 0, %s330
    %s345 = sphi 0, %s331
    %s349 = sphi 0, %s349
    %s351 = sphi 0, %s349
    %s352 = sphi 0, %s351
    %s366 = sphi 0, %s352
    %s370 = sphi 0, %s370
    %s372 = sphi 0, %s370
    %s373 = sphi 0, %s372
    %s387 = sphi 0, %s373
    %s391 = sphi 0, %s391
    %s393 = sphi 0, %s391
    %s394 = sphi 0, %s393
    %s408 = sphi 0, %s394
    %s414 = sphi 0, %s416
    %s417 = sphi 0, %s414
    %s418 = sphi 0, %s417
    %s434 = sphi 0, %s418
  $region4: #{tpu_custom_call.1} parent=0 // loop_header_branch
    %30 = sbr.rel (%p28) target = $region8
  $region5: #{tpu_custom_call.1} parent=0 // loop_body
    %s32 = ssub.s32 %s27, 1
    %s33 = ssub.s32 %s27, 2
    %s34 = sadd.s32 %s27, 1
    %s35 = ssub.s32 %s27, %s34
    %p36 = scmp.eq.s32.totalorder %s35, 0
    %s38 = sadd.s32 %s37, 1
    %s39 = scalar_select %p36, %s37, %s38
    %p42 = pneg %p36
    %p43 = scmp.eq.s32.totalorder %s27, 1
    %p44 = por %p42, %p43
    %p45 = scmp.ne.s32.totalorder %s37, %s40
    %p46 = scmp.eq.s32.totalorder %s27, 0
    %p47 = por %p45, %p46
    %p48 = scmp.ne.s32.totalorder %s37, %s40
    %p49 = scmp.eq.s32.totalorder %s32, 1
    %p50 = por %p48, %p49
    %p51 = scmp.ne.s32.totalorder %s40, %s41
    %p52 = scmp.eq.s32.totalorder %s32, 0
    %p53 = por %p51, %p52
    %p54 = scmp.ne.s32.totalorder %s40, %s41
    %p55 = scmp.eq.s32.totalorder %s33, 1
    %p56 = por %p54, %p55
    %p58 = scmp.ne.s32.totalorder %s41, %s57
    %p59 = scmp.eq.s32.totalorder %s33, 0
    %p60 = por %p58, %p59
    %s61 = ssub.s32 %s27, %s34
    %p62 = scmp.eq.s32.totalorder %s61, 0
    %s64 = sadd.s32 %s63, 1
    %s65 = scalar_select %p62, %s63, %s64
    %p68 = pneg %p62
    %p69 = scmp.eq.s32.totalorder %s27, 1
    %p70 = por %p68, %p69
    %p71 = scmp.ne.s32.totalorder %s63, %s66
    %p72 = scmp.eq.s32.totalorder %s27, 0
    %p73 = por %p71, %p72
    %p74 = scmp.ne.s32.totalorder %s63, %s66
    %p75 = scmp.eq.s32.totalorder %s32, 1
    %p76 = por %p74, %p75
    %p77 = scmp.ne.s32.totalorder %s66, %s67
    %p78 = scmp.eq.s32.totalorder %s32, 0
    %p79 = por %p77, %p78
    %p80 = scmp.ne.s32.totalorder %s66, %s67
    %p81 = scmp.eq.s32.totalorder %s33, 1
    %p82 = por %p80, %p81
    %p84 = scmp.ne.s32.totalorder %s67, %s83
    %p85 = scmp.eq.s32.totalorder %s33, 0
    %p86 = por %p84, %p85
    %s87 = ssub.s32 %s27, %s34
    %p88 = scmp.eq.s32.totalorder %s87, 0
    %s90 = sadd.s32 %s89, 1
    %s91 = scalar_select %p88, %s89, %s90
    %p94 = pneg %p88
    %p95 = scmp.eq.s32.totalorder %s27, 1
    %p96 = por %p94, %p95
    %p97 = scmp.ne.s32.totalorder %s89, %s92
    %p98 = scmp.eq.s32.totalorder %s27, 0
    %p99 = por %p97, %p98
    %p100 = scmp.ne.s32.totalorder %s89, %s92
    %p101 = scmp.eq.s32.totalorder %s32, 1
    %p102 = por %p100, %p101
    %p103 = scmp.ne.s32.totalorder %s92, %s93
    %p104 = scmp.eq.s32.totalorder %s32, 0
    %p105 = por %p103, %p104
    %p106 = scmp.ne.s32.totalorder %s92, %s93
    %p107 = scmp.eq.s32.totalorder %s33, 1
    %p108 = por %p106, %p107
    %p110 = scmp.ne.s32.totalorder %s93, %s109
    %p111 = scmp.eq.s32.totalorder %s33, 0
    %p112 = por %p110, %p111
    %s113 = ssub.s32 %s27, %s34
    %p114 = scmp.eq.s32.totalorder %s113, 0
    %s116 = sadd.s32 %s115, 1
    %s117 = scalar_select %p114, %s115, %s116
    %p120 = pneg %p114
    %p121 = scmp.eq.s32.totalorder %s27, 1
    %p122 = por %p120, %p121
    %p123 = scmp.ne.s32.totalorder %s115, %s118
    %p124 = scmp.eq.s32.totalorder %s27, 0
    %p125 = por %p123, %p124
    %p126 = scmp.ne.s32.totalorder %s115, %s118
    %p127 = scmp.eq.s32.totalorder %s32, 1
    %p128 = por %p126, %p127
    %p129 = scmp.ne.s32.totalorder %s118, %s119
    %p130 = scmp.eq.s32.totalorder %s32, 0
    %p131 = por %p129, %p130
    %p132 = scmp.ne.s32.totalorder %s118, %s119
    %p133 = scmp.eq.s32.totalorder %s33, 1
    %p134 = por %p132, %p133
    %p136 = scmp.ne.s32.totalorder %s119, %s135
    %p137 = scmp.eq.s32.totalorder %s33, 0
    %p138 = por %p136, %p137
    %s140 = sadd.s32 %s139, 1
    %p143 = scmp.eq.s32.totalorder %s27, 1
    %p144 = scmp.ne.s32.totalorder %s139, %s141
    %p145 = scmp.eq.s32.totalorder %s27, 0
    %p146 = por %p144, %p145
    %p147 = scmp.ne.s32.totalorder %s139, %s141
    %p148 = scmp.eq.s32.totalorder %s32, 1
    %p149 = por %p147, %p148
    %p150 = scmp.ne.s32.totalorder %s141, %s142
    %p151 = scmp.eq.s32.totalorder %s32, 0
    %p152 = por %p150, %p151
    %p153 = scmp.ne.s32.totalorder %s141, %s142
    %p154 = scmp.eq.s32.totalorder %s33, 1
    %p155 = por %p153, %p154
    %p157 = scmp.ne.s32.totalorder %s142, %s156
    %p158 = scmp.eq.s32.totalorder %s33, 0
    %p159 = por %p157, %p158
    %s161 = sadd.s32 %s160, 1
    %p164 = scmp.eq.s32.totalorder %s27, 1
    %p165 = scmp.ne.s32.totalorder %s160, %s162
    %p166 = scmp.eq.s32.totalorder %s27, 0
    %p167 = por %p165, %p166
    %p168 = scmp.ne.s32.totalorder %s160, %s162
    %p169 = scmp.eq.s32.totalorder %s32, 1
    %p170 = por %p168, %p169
    %p171 = scmp.ne.s32.totalorder %s162, %s163
    %p172 = scmp.eq.s32.totalorder %s32, 0
    %p173 = por %p171, %p172
    %p174 = scmp.ne.s32.totalorder %s162, %s163
    %p175 = scmp.eq.s32.totalorder %s33, 1
    %p176 = por %p174, %p175
    %p178 = scmp.ne.s32.totalorder %s163, %s177
    %p179 = scmp.eq.s32.totalorder %s33, 0
    %p180 = por %p178, %p179
    %s182 = sadd.s32 %s181, 1
    %p185 = scmp.eq.s32.totalorder %s27, 1
    %p186 = scmp.ne.s32.totalorder %s181, %s183
    %p187 = scmp.eq.s32.totalorder %s27, 0
    %p188 = por %p186, %p187
    %p189 = scmp.ne.s32.totalorder %s181, %s183
    %p190 = scmp.eq.s32.totalorder %s32, 1
    %p191 = por %p189, %p190
    %p192 = scmp.ne.s32.totalorder %s183, %s184
    %p193 = scmp.eq.s32.totalorder %s32, 0
    %p194 = por %p192, %p193
    %p195 = scmp.ne.s32.totalorder %s183, %s184
    %p196 = scmp.eq.s32.totalorder %s33, 1
    %p197 = por %p195, %p196
    %p199 = scmp.ne.s32.totalorder %s184, %s198
    %p200 = scmp.eq.s32.totalorder %s33, 0
    %p201 = por %p199, %p200
    %s203 = sadd.s32 %s202, 1
    %p206 = scmp.eq.s32.totalorder %s27, 1
    %p207 = scmp.ne.s32.totalorder %s202, %s204
    %p208 = scmp.eq.s32.totalorder %s27, 0
    %p209 = por %p207, %p208
    %p210 = scmp.ne.s32.totalorder %s202, %s204
    %p211 = scmp.eq.s32.totalorder %s32, 1
    %p212 = por %p210, %p211
    %p213 = scmp.ne.s32.totalorder %s204, %s205
    %p214 = scmp.eq.s32.totalorder %s32, 0
    %p215 = por %p213, %p214
    %p216 = scmp.ne.s32.totalorder %s204, %s205
    %p217 = scmp.eq.s32.totalorder %s33, 1
    %p218 = por %p216, %p217
    %p220 = scmp.ne.s32.totalorder %s205, %s219
    %p221 = scmp.eq.s32.totalorder %s33, 0
    %p222 = por %p220, %p221
    %s224 = sadd.s32 %s223, 1
    %p227 = scmp.eq.s32.totalorder %s27, 1
    %p228 = scmp.ne.s32.totalorder %s223, %s225
    %p229 = scmp.eq.s32.totalorder %s27, 0
    %p230 = por %p228, %p229
    %p231 = scmp.ne.s32.totalorder %s223, %s225
    %p232 = scmp.eq.s32.totalorder %s32, 1
    %p233 = por %p231, %p232
    %p234 = scmp.ne.s32.totalorder %s225, %s226
    %p235 = scmp.eq.s32.totalorder %s32, 0
    %p236 = por %p234, %p235
    %p237 = scmp.ne.s32.totalorder %s225, %s226
    %p238 = scmp.eq.s32.totalorder %s33, 1
    %p239 = por %p237, %p238
    %p241 = scmp.ne.s32.totalorder %s226, %s240
    %p242 = scmp.eq.s32.totalorder %s33, 0
    %p243 = por %p241, %p242
    %s245 = sadd.s32 %s244, 1
    %p248 = scmp.eq.s32.totalorder %s27, 1
    %p249 = scmp.ne.s32.totalorder %s244, %s246
    %p250 = scmp.eq.s32.totalorder %s27, 0
    %p251 = por %p249, %p250
    %p252 = scmp.ne.s32.totalorder %s244, %s246
    %p253 = scmp.eq.s32.totalorder %s32, 1
    %p254 = por %p252, %p253
    %p255 = scmp.ne.s32.totalorder %s246, %s247
    %p256 = scmp.eq.s32.totalorder %s32, 0
    %p257 = por %p255, %p256
    %p258 = scmp.ne.s32.totalorder %s246, %s247
    %p259 = scmp.eq.s32.totalorder %s33, 1
    %p260 = por %p258, %p259
    %p262 = scmp.ne.s32.totalorder %s247, %s261
    %p263 = scmp.eq.s32.totalorder %s33, 0
    %p264 = por %p262, %p263
    %s266 = sadd.s32 %s265, 1
    %p269 = scmp.eq.s32.totalorder %s27, 1
    %p270 = scmp.ne.s32.totalorder %s265, %s267
    %p271 = scmp.eq.s32.totalorder %s27, 0
    %p272 = por %p270, %p271
    %p273 = scmp.ne.s32.totalorder %s265, %s267
    %p274 = scmp.eq.s32.totalorder %s32, 1
    %p275 = por %p273, %p274
    %p276 = scmp.ne.s32.totalorder %s267, %s268
    %p277 = scmp.eq.s32.totalorder %s32, 0
    %p278 = por %p276, %p277
    %p279 = scmp.ne.s32.totalorder %s267, %s268
    %p280 = scmp.eq.s32.totalorder %s33, 1
    %p281 = por %p279, %p280
    %p283 = scmp.ne.s32.totalorder %s268, %s282
    %p284 = scmp.eq.s32.totalorder %s33, 0
    %p285 = por %p283, %p284
    %s287 = sadd.s32 %s286, 1
    %p290 = scmp.eq.s32.totalorder %s27, 1
    %p291 = scmp.ne.s32.totalorder %s286, %s288
    %p292 = scmp.eq.s32.totalorder %s27, 0
    %p293 = por %p291, %p292
    %p294 = scmp.ne.s32.totalorder %s286, %s288
    %p295 = scmp.eq.s32.totalorder %s32, 1
    %p296 = por %p294, %p295
    %p297 = scmp.ne.s32.totalorder %s288, %s289
    %p298 = scmp.eq.s32.totalorder %s32, 0
    %p299 = por %p297, %p298
    %p300 = scmp.ne.s32.totalorder %s288, %s289
    %p301 = scmp.eq.s32.totalorder %s33, 1
    %p302 = por %p300, %p301
    %p304 = scmp.ne.s32.totalorder %s289, %s303
    %p305 = scmp.eq.s32.totalorder %s33, 0
    %p306 = por %p304, %p305
    %s308 = sadd.s32 %s307, 1
    %p311 = scmp.eq.s32.totalorder %s27, 1
    %p312 = scmp.ne.s32.totalorder %s307, %s309
    %p313 = scmp.eq.s32.totalorder %s27, 0
    %p314 = por %p312, %p313
    %p315 = scmp.ne.s32.totalorder %s307, %s309
    %p316 = scmp.eq.s32.totalorder %s32, 1
    %p317 = por %p315, %p316
    %p318 = scmp.ne.s32.totalorder %s309, %s310
    %p319 = scmp.eq.s32.totalorder %s32, 0
    %p320 = por %p318, %p319
    %p321 = scmp.ne.s32.totalorder %s309, %s310
    %p322 = scmp.eq.s32.totalorder %s33, 1
    %p323 = por %p321, %p322
    %p325 = scmp.ne.s32.totalorder %s310, %s324
    %p326 = scmp.eq.s32.totalorder %s33, 0
    %p327 = por %p325, %p326
    %s329 = sadd.s32 %s328, 1
    %p332 = scmp.eq.s32.totalorder %s27, 1
    %p333 = scmp.ne.s32.totalorder %s328, %s330
    %p334 = scmp.eq.s32.totalorder %s27, 0
    %p335 = por %p333, %p334
    %p336 = scmp.ne.s32.totalorder %s328, %s330
    %p337 = scmp.eq.s32.totalorder %s32, 1
    %p338 = por %p336, %p337
    %p339 = scmp.ne.s32.totalorder %s330, %s331
    %p340 = scmp.eq.s32.totalorder %s32, 0
    %p341 = por %p339, %p340
    %p342 = scmp.ne.s32.totalorder %s330, %s331
    %p343 = scmp.eq.s32.totalorder %s33, 1
    %p344 = por %p342, %p343
    %p346 = scmp.ne.s32.totalorder %s331, %s345
    %p347 = scmp.eq.s32.totalorder %s33, 0
    %p348 = por %p346, %p347
    %s350 = sadd.s32 %s349, 1
    %p353 = scmp.eq.s32.totalorder %s27, 1
    %p354 = scmp.ne.s32.totalorder %s349, %s351
    %p355 = scmp.eq.s32.totalorder %s27, 0
    %p356 = por %p354, %p355
    %p357 = scmp.ne.s32.totalorder %s349, %s351
    %p358 = scmp.eq.s32.totalorder %s32, 1
    %p359 = por %p357, %p358
    %p360 = scmp.ne.s32.totalorder %s351, %s352
    %p361 = scmp.eq.s32.totalorder %s32, 0
    %p362 = por %p360, %p361
    %p363 = scmp.ne.s32.totalorder %s351, %s352
    %p364 = scmp.eq.s32.totalorder %s33, 1
    %p365 = por %p363, %p364
    %p367 = scmp.ne.s32.totalorder %s352, %s366
    %p368 = scmp.eq.s32.totalorder %s33, 0
    %p369 = por %p367, %p368
    %s371 = sadd.s32 %s370, 1
    %p374 = scmp.eq.s32.totalorder %s27, 1
    %p375 = scmp.ne.s32.totalorder %s370, %s372
    %p376 = scmp.eq.s32.totalorder %s27, 0
    %p377 = por %p375, %p376
    %p378 = scmp.ne.s32.totalorder %s370, %s372
    %p379 = scmp.eq.s32.totalorder %s32, 1
    %p380 = por %p378, %p379
    %p381 = scmp.ne.s32.totalorder %s372, %s373
    %p382 = scmp.eq.s32.totalorder %s32, 0
    %p383 = por %p381, %p382
    %p384 = scmp.ne.s32.totalorder %s372, %s373
    %p385 = scmp.eq.s32.totalorder %s33, 1
    %p386 = por %p384, %p385
    %p388 = scmp.ne.s32.totalorder %s373, %s387
    %p389 = scmp.eq.s32.totalorder %s33, 0
    %p390 = por %p388, %p389
    %s392 = sadd.s32 %s391, 1
    %p395 = scmp.eq.s32.totalorder %s27, 1
    %p396 = scmp.ne.s32.totalorder %s391, %s393
    %p397 = scmp.eq.s32.totalorder %s27, 0
    %p398 = por %p396, %p397
    %p399 = scmp.ne.s32.totalorder %s391, %s393
    %p400 = scmp.eq.s32.totalorder %s32, 1
    %p401 = por %p399, %p400
    %p402 = scmp.ne.s32.totalorder %s393, %s394
    %p403 = scmp.eq.s32.totalorder %s32, 0
    %p404 = por %p402, %p403
    %p405 = scmp.ne.s32.totalorder %s393, %s394
    %p406 = scmp.eq.s32.totalorder %s33, 1
    %p407 = por %p405, %p406
    %p409 = scmp.ne.s32.totalorder %s394, %s408
    %p410 = scmp.eq.s32.totalorder %s33, 0
    %p411 = por %p409, %p410
    %s412 = ssub.s32 %s27, %s34
    %p413 = scmp.eq.s32.totalorder %s412, 0
    %s415 = sadd.s32 %s414, 1
    %s416 = scalar_select %p413, %s414, %s415
    %p419 = pneg %p413
    %p420 = scmp.eq.s32.totalorder %s27, 1
    %p421 = por %p419, %p420
    %p422 = scmp.ne.s32.totalorder %s414, %s417
    %p423 = scmp.eq.s32.totalorder %s27, 0
    %p424 = por %p422, %p423
    %p425 = scmp.ne.s32.totalorder %s414, %s417
    %p426 = scmp.eq.s32.totalorder %s32, 1
    %p427 = por %p425, %p426
    %p428 = scmp.ne.s32.totalorder %s417, %s418
    %p429 = scmp.eq.s32.totalorder %s32, 0
    %p430 = por %p428, %p429
    %p431 = scmp.ne.s32.totalorder %s417, %s418
    %p432 = scmp.eq.s32.totalorder %s33, 1
    %p433 = por %p431, %p432
    %p435 = scmp.ne.s32.totalorder %s418, %s434
    %p436 = scmp.eq.s32.totalorder %s33, 0
    %p437 = por %p435, %p436
    %p438 = scmp.le.s32.totalorder 1, %s27
    %p439 = scmp.lt.s32.totalorder %s27, 3
    %p440 = pnand %p438, %p439
    %p441 = pneg %p440
    // Predicated region
    $region9: #{tpu_custom_call.1} parent=5 // pred_check
      _
    $region10: #{tpu_custom_call.1} parent=5 // pred_check_branch
      %443 = sbr.rel (%p440) target = $region12
    $region11: #{tpu_custom_call.1} parent=5 // pred_region
      %s444 = ssub.s32 %s27, 1
      // Predicated region
      $region13: #{tpu_custom_call.1} parent=11 // pred_check
        %p445 = pneg %p152
      $region14: #{tpu_custom_call.1} parent=11 // pred_check_branch
        %447 = sbr.rel (%p445) target = $region16
      $region15: #{tpu_custom_call.1} parent=11 // pred_region
        _
      $region16: #{tpu_custom_call.1} parent=11 // pred_fallthru
        _
      // Predicated region
      $region17: #{tpu_custom_call.1} parent=11 // pred_check
        %p448 = pneg %p173
      $region18: #{tpu_custom_call.1} parent=11 // pred_check_branch
        %450 = sbr.rel (%p448) target = $region20
      $region19: #{tpu_custom_call.1} parent=11 // pred_region
        _
      $region20: #{tpu_custom_call.1} parent=11 // pred_fallthru
        _
      // Predicated region
      $region21: #{tpu_custom_call.1} parent=11 // pred_check
        %p451 = pneg %p194
      $region22: #{tpu_custom_call.1} parent=11 // pred_check_branch
        %453 = sbr.rel (%p451) target = $region24
      $region23: #{tpu_custom_call.1} parent=11 // pred_region
        _
      $region24: #{tpu_custom_call.1} parent=11 // pred_fallthru
        _
      // Predicated region
      $region25: #{tpu_custom_call.1} parent=11 // pred_check
        %p454 = pneg %p215
      $region26: #{tpu_custom_call.1} parent=11 // pred_check_branch
        %456 = sbr.rel (%p454) target = $region28
      $region27: #{tpu_custom_call.1} parent=11 // pred_region
        _
      $region28: #{tpu_custom_call.1} parent=11 // pred_fallthru
        _
      // Predicated region
      $region29: #{tpu_custom_call.1} parent=11 // pred_check
        %p457 = pneg %p236
      $region30: #{tpu_custom_call.1} parent=11 // pred_check_branch
        %459 = sbr.rel (%p457) target = $region32
      $region31: #{tpu_custom_call.1} parent=11 // pred_region
        _
      $region32: #{tpu_custom_call.1} parent=11 // pred_fallthru
        _
      // Predicated region
      $region33: #{tpu_custom_call.1} parent=11 // pred_check
        %p460 = pneg %p257
      $region34: #{tpu_custom_call.1} parent=11 // pred_check_branch
        %462 = sbr.rel (%p460) target = $region36
      $region35: #{tpu_custom_call.1} parent=11 // pred_region
        _
      $region36: #{tpu_custom_call.1} parent=11 // pred_fallthru
        _
      // Predicated region
      $region37: #{tpu_custom_call.1} parent=11 // pred_check
        %p463 = pneg %p278
      $region38: #{tpu_custom_call.1} parent=11 // pred_check_branch
        %465 = sbr.rel (%p463) target = $region40
      $region39: #{tpu_custom_call.1} parent=11 // pred_region
        _
      $region40: #{tpu_custom_call.1} parent=11 // pred_fallthru
        _
      // Predicated region
      $region41: #{tpu_custom_call.1} parent=11 // pred_check
        %p466 = pneg %p299
      $region42: #{tpu_custom_call.1} parent=11 // pred_check_branch
        %468 = sbr.rel (%p466) target = $region44
      $region43: #{tpu_custom_call.1} parent=11 // pred_region
        _
      $region44: #{tpu_custom_call.1} parent=11 // pred_fallthru
        _
      // Predicated region
      $region45: #{tpu_custom_call.1} parent=11 // pred_check
        %p469 = pneg %p320
      $region46: #{tpu_custom_call.1} parent=11 // pred_check_branch
        %471 = sbr.rel (%p469) target = $region48
      $region47: #{tpu_custom_call.1} parent=11 // pred_region
        _
      $region48: #{tpu_custom_call.1} parent=11 // pred_fallthru
        _
      // Predicated region
      $region49: #{tpu_custom_call.1} parent=11 // pred_check
        %p472 = pneg %p341
      $region50: #{tpu_custom_call.1} parent=11 // pred_check_branch
        %474 = sbr.rel (%p472) target = $region52
      $region51: #{tpu_custom_call.1} parent=11 // pred_region
        _
      $region52: #{tpu_custom_call.1} parent=11 // pred_fallthru
        _
      // Predicated region
      $region53: #{tpu_custom_call.1} parent=11 // pred_check
        %p475 = pneg %p362
      $region54: #{tpu_custom_call.1} parent=11 // pred_check_branch
        %477 = sbr.rel (%p475) target = $region56
      $region55: #{tpu_custom_call.1} parent=11 // pred_region
        _
      $region56: #{tpu_custom_call.1} parent=11 // pred_fallthru
        _
      // Predicated region
      $region57: #{tpu_custom_call.1} parent=11 // pred_check
        %p478 = pneg %p383
      $region58: #{tpu_custom_call.1} parent=11 // pred_check_branch
        %480 = sbr.rel (%p478) target = $region60
      $region59: #{tpu_custom_call.1} parent=11 // pred_region
        _
      $region60: #{tpu_custom_call.1} parent=11 // pred_fallthru
        _
      // Predicated region
      $region61: #{tpu_custom_call.1} parent=11 // pred_check
        %p481 = pneg %p404
      $region62: #{tpu_custom_call.1} parent=11 // pred_check_branch
        %483 = sbr.rel (%p481) target = $region64
      $region63: #{tpu_custom_call.1} parent=11 // pred_region
        _
      $region64: #{tpu_custom_call.1} parent=11 // pred_fallthru
        _
    $region12: #{tpu_custom_call.1} parent=5 // pred_fallthru
      _
    %p484 = scmp.lt.s32.totalorder %s27, 2
    // Predicated region
    $region65: #{tpu_custom_call.1} parent=5 // pred_check
      %p485 = pneg %p484
    $region66: #{tpu_custom_call.1} parent=5 // pred_check_branch
      %487 = sbr.rel (%p485) target = $region68
    $region67: #{tpu_custom_call.1} parent=5 // pred_region
      // Predicated region
      $region69: #{tpu_custom_call.1} parent=67 // pred_check
        %p488 = pneg %p47
      $region70: #{tpu_custom_call.1} parent=67 // pred_check_branch
        %490 = sbr.rel (%p488) target = $region72
      $region71: #{tpu_custom_call.1} parent=67 // pred_region
        %p491 = scmp.lt.s32.totalorder %s27, 1
        %s492 = scalar_select %p491, %s27, 1
        %s493 = smul.addr %s492, 8
        %s494 = scalar_lea.vmem %s0, %s493
      $region72: #{tpu_custom_call.1} parent=67 // pred_fallthru
        _
      // Predicated region
      $region73: #{tpu_custom_call.1} parent=67 // pred_check
        %p495 = pneg %p73
      $region74: #{tpu_custom_call.1} parent=67 // pred_check_branch
        %497 = sbr.rel (%p495) target = $region76
      $region75: #{tpu_custom_call.1} parent=67 // pred_region
        %p498 = scmp.lt.s32.totalorder %s27, 1
        %s499 = scalar_select %p498, %s27, 1
        %s500 = smul.addr %s499, 8
        %s501 = scalar_lea.vmem %s1, %s500
      $region76: #{tpu_custom_call.1} parent=67 // pred_fallthru
        _
      // Predicated region
      $region77: #{tpu_custom_call.1} parent=67 // pred_check
        %p502 = pneg %p99
      $region78: #{tpu_custom_call.1} parent=67 // pred_check_branch
        %504 = sbr.rel (%p502) target = $region80
      $region79: #{tpu_custom_call.1} parent=67 // pred_region
        %p505 = scmp.lt.s32.totalorder %s27, 1
        %s506 = scalar_select %p505, %s27, 1
        %s507 = smul.addr %s506, 8
        %s508 = scalar_lea.vmem %s2, %s507
      $region80: #{tpu_custom_call.1} parent=67 // pred_fallthru
        _
      // Predicated region
      $region81: #{tpu_custom_call.1} parent=67 // pred_check
        %p509 = pneg %p125
      $region82: #{tpu_custom_call.1} parent=67 // pred_check_branch
        %511 = sbr.rel (%p509) target = $region84
      $region83: #{tpu_custom_call.1} parent=67 // pred_region
        %p512 = scmp.lt.s32.totalorder %s27, 1
        %s513 = scalar_select %p512, %s27, 1
        %s514 = smul.addr %s513, 8
        %s515 = scalar_lea.vmem %s3, %s514
      $region84: #{tpu_custom_call.1} parent=67 // pred_fallthru
        _
    $region68: #{tpu_custom_call.1} parent=5 // pred_fallthru
      _
    %p516 = scmp.le.s32.totalorder 1, %s27
    %p517 = scmp.lt.s32.totalorder %s27, 3
    %p518 = pnand %p516, %p517
    %p519 = pneg %p518
    // Predicated region
    $region85: #{tpu_custom_call.1} parent=5 // pred_check
      _
    $region86: #{tpu_custom_call.1} parent=5 // pred_check_branch
      %521 = sbr.rel (%p518) target = $region88
    $region87: #{tpu_custom_call.1} parent=5 // pred_region
      %s522 = ssub.s32 %s27, 1
      %p523 = scmp.lt.s32.totalorder %s32, 1
      %s524 = scalar_select %p523, %s32, 1
      %s525 = smul.addr %s524, 8
      %s526 = scalar_lea.vmem %s0, %s525
      %p527 = pneg %p53
      %p528 = pneg %p50
      %p529 = scmp.lt.s32.totalorder %s32, 1
      %s530 = scalar_select %p529, %s32, 1
      %s531 = smul.addr %s530, 8
      %s532 = scalar_lea.vmem %s1, %s531
      %p533 = pneg %p79
      %p534 = pneg %p76
      %p535 = scmp.lt.s32.totalorder %s32, 1
      %s536 = scalar_select %p535, %s32, 1
      %s537 = smul.addr %s536, 8
      %s538 = scalar_lea.vmem %s2, %s537
      %p539 = pneg %p105
      %p540 = pneg %p102
      %p541 = scmp.lt.s32.totalorder %s32, 1
      %s542 = scalar_select %p541, %s32, 1
      %s543 = smul.addr %s542, 8
      %s544 = scalar_lea.vmem %s3, %s543
      %p545 = pneg %p131
      %p546 = pneg %p128
      %p547 = pneg %p152
      %p548 = pneg %p149
      %p549 = pneg %p173
      %p550 = pneg %p170
      %p551 = pneg %p194
      %p552 = pneg %p191
      %p553 = pneg %p215
      %p554 = pneg %p212
      %p555 = pneg %p236
      %p556 = pneg %p233
      %p557 = pneg %p257
      %p558 = pneg %p254
      %p559 = pneg %p278
      %p560 = pneg %p275
      %p561 = pneg %p299
      %p562 = pneg %p296
      %p563 = pneg %p320
      %p564 = pneg %p317
      %p565 = pneg %p341
      %p566 = pneg %p338
      %p567 = pneg %p362
      %p568 = pneg %p359
      %p569 = pneg %p383
      %p570 = pneg %p380
      %p571 = pneg %p404
      %p572 = pneg %p401
      %p573 = pneg %p430
      %p574 = pneg %p427
      %p575 = scmp.lt.s32.totalorder %s32, 1
      %s576 = scalar_select %p575, %s32, 1
      %s577 = smul.addr %s576, 8
      %s578 = scalar_lea.vmem %s17, %s577
      %p579 = scmp.lt.s32.totalorder %s32, 1
      %s580 = scalar_select %p579, %s32, 1
      %s581 = smul.addr %s580, 8
      %s582 = scalar_lea.vmem %s0, %s581
      %p583 = scmp.lt.s32.totalorder %s32, 1
      %s584 = scalar_select %p583, %s32, 1
      %s585 = smul.addr %s584, 8
      %s586 = scalar_lea.vmem %s1, %s585
      %p587 = scmp.lt.s32.totalorder %s32, 1
      %s588 = scalar_select %p587, %s32, 1
      %s589 = smul.addr %s588, 8
      %s590 = scalar_lea.vmem %s2, %s589
      %p591 = scmp.lt.s32.totalorder %s32, 1
      %s592 = scalar_select %p591, %s32, 1
      %s593 = smul.addr %s592, 8
      %s594 = scalar_lea.vmem %s3, %s593
      %p595 = scmp.lt.s32.totalorder %s32, 1
      %s596 = scalar_select %p595, %s32, 1
      %s597 = smul.addr %s596, 8
      %s598 = scalar_lea.vmem %s17, %s597
      %v599 = vld [vmem:[%s586] sm:$0xff]
      %v600 = vmul.f32 %v599, 0.5
      %v601 = vtanh.pop %v600
      %v602 = vmul.f32 %v601, 0.5
      %v603 = vadd.f32 %v602, 0.5
      %v604 = vmul.f32 %v603, 2.0
      %v605 = vld [vmem:[%s590] sm:$0xff]
      %v606 = vmul.f32 %v605, 0.5
      %v607 = vtanh.pop %v606
      %v608 = vmul.f32 %v607, 0.5
      %v609 = vadd.f32 %v608, 0.5
      %v610 = vmul.f32 %v609, 2.0
      %v611 = vld [vmem:[%s594] sm:$0xff]
      %v612 = vmul.f32 %v611, 0.5
      %v613 = vtanh.pop %v612
      %v614 = vmul.f32 %v613, 0.5
      %v615 = vadd.f32 %v614, 0.5
      %v616 = vmul.f32 %v615, 2.0
      %vm617 = vcmp.gt.f32.partialorder %v604, 1.0
      %v618 = vsel %vm617, %v604, %v610
      %v619 = vsel %vm617, %v604, %v616
      %v620 = vld [vmem:[%s4] sm:$0xff]
      %vm621 = vcmask 64512
      %v623 = vsel %vm621, %v618, 0
      %v626 = vsel %vm621, %v619, 0
      %v629 = vsel %vm621, %v604, 0
      %631 = vmatpush.msra.mxu0 0.0
      %632 = vmatpush.msra.mxu0 0.0
      %633 = vmatpush.msra.mxu0 0.0
      %634 = vmatpush.msra.mxu0 0.0
      %635 = vmatpush.msra.mxu0 0.0
      %636 = vmatpush.msra.mxu0 0.0
      %637 = vmatpush.msra.mxu0 0.0
      %638 = vmatpush.msra.mxu0 0.0
      %639 = vmatpush.msra.mxu0 0.0
      %640 = vmatpush.msra.mxu0 0.0
      %641 = vmatpush.msra.mxu0 0.0
      %642 = vmatpush.msra.mxu0 0.0
      %643 = vmatpush.msra.mxu0 0.0
      %644 = vmatpush.msra.mxu0 0.0
      %645 = vmatpush.msra.mxu0 0.0
      %646 = vmatpush.msra.mxu0 %v620
      %647 = vmatmul.f32.gmra.mxu0 %v623
      %v648 = vpop.f32.mrf.mxu0
      %v649 = vadd.f32 0.0, %v648
      %650 = vmatmul.f32.gmra.mxu0 %v626
      %v651 = vpop.f32.mrf.mxu0
      %v652 = vadd.f32 0.0, %v651
      %653 = vmatmul.f32.gmra.mxu0 %v629
      %v654 = vpop.f32.mrf.mxu0
      %v655 = vadd.f32 0.0, %v654
      %656 = vdwg.mxu0
      %v657 = vld [vmem:[%s582] sm:$0xff]
      %v658 = vmul.f32 %v657, %v655
      %v659 = vmul.f32 %v657, %v649
      %v660 = vmul.f32 %v657, %v652
      %v661 = vld [vmem:[%s5] sm:$0xff]
      %v662 = vld [vmem:[%s5 + $0x8] sm:$0xff]
      %v663 = vld [vmem:[%s5 + $0x10] sm:$0xff]
      %v664 = vld [vmem:[%s5 + $0x18] sm:$0xff]
      %v665 = vld [vmem:[%s5 + $0x20] sm:$0xff]
      %v666 = vld [vmem:[%s5 + $0x28] sm:$0xff]
      %v667 = vld [vmem:[%s5 + $0x30] sm:$0xff]
      %v668 = vld [vmem:[%s5 + $0x38] sm:$0xff]
      %v669 = vld [vmem:[%s6] sm:$0x1]
      %v671 = vperm.slane %v669, 0
      %vm673 = vcmask 523264
      %v675 = vsel %vm673, %v659, 0
      %v678 = vsel %vm673, %v658, 0
      %680 = vmatpush.msra.mxu0 0.0
      %681 = vmatpush.msra.mxu0 0.0
      %682 = vmatpush.msra.mxu0 0.0
      %683 = vmatpush.msra.mxu0 0.0
      %684 = vmatpush.msra.mxu0 0.0
      %685 = vmatpush.msra.mxu0 0.0
      %686 = vmatpush.msra.mxu0 0.0
      %687 = vmatpush.msra.mxu0 0.0
      %688 = vmatpush.msra.mxu0 %v668
      %689 = vmatpush.msra.mxu0 %v667
      %690 = vmatpush.msra.mxu0 %v666
      %691 = vmatpush.msra.mxu0 %v665
      %692 = vmatpush.msra.mxu0 %v664
      %693 = vmatpush.msra.mxu0 %v663
      %694 = vmatpush.msra.mxu0 %v662
      %695 = vmatpush.msra.mxu0 %v661
      %696 = vmatmul.f32.gmra.mxu0 %v675
      %v697 = vpop.f32.mrf.mxu0
      %v698 = vadd.f32 %v671, %v697
      %699 = vmatmul.f32.gmra.mxu0 %v678
      %v700 = vpop.f32.mrf.mxu0
      %v701 = vadd.f32 %v671, %v700
      %702 = vdwg.mxu0
      %v703 = vmax.f32 %v698, 0.0
      %v704 = vmax.f32 %v701, 0.0
      %v705 = vld [vmem:[%s7] sm:$0xff]
      %v706 = vld [vmem:[%s7 + $0x8] sm:$0xff]
      %v707 = vld [vmem:[%s7 + $0x10] sm:$0xff]
      %v708 = vld [vmem:[%s7 + $0x18] sm:$0xff]
      %v709 = vld [vmem:[%s8] sm:$0x1]
      %v711 = vperm.slane %v709, 0
      %vm713 = vcmask 261120
      %v715 = vsel %vm713, %v703, 0
      %v718 = vsel %vm713, %v704, 0
      %720 = vmatpush.msra.mxu0 0.0
      %721 = vmatpush.msra.mxu0 0.0
      %722 = vmatpush.msra.mxu0 0.0
      %723 = vmatpush.msra.mxu0 0.0
      %724 = vmatpush.msra.mxu0 0.0
      %725 = vmatpush.msra.mxu0 0.0
      %726 = vmatpush.msra.mxu0 0.0
      %727 = vmatpush.msra.mxu0 0.0
      %728 = vmatpush.msra.mxu0 0.0
      %729 = vmatpush.msra.mxu0 0.0
      %730 = vmatpush.msra.mxu0 0.0
      %731 = vmatpush.msra.mxu0 0.0
      %732 = vmatpush.msra.mxu0 %v708
      %733 = vmatpush.msra.mxu0 %v707
      %734 = vmatpush.msra.mxu0 %v706
      %735 = vmatpush.msra.mxu0 %v705
      %736 = vmatmul.f32.gmra.mxu0 %v715
      %v737 = vpop.f32.mrf.mxu0
      %v738 = vadd.f32 %v711, %v737
      %739 = vmatmul.f32.gmra.mxu0 %v718
      %v740 = vpop.f32.mrf.mxu0
      %v741 = vadd.f32 %v711, %v740
      %742 = vdwg.mxu0
      %v743 = vmax.f32 %v738, 0.0
      %v744 = vmax.f32 %v741, 0.0
      %v745 = vld [vmem:[%s9] sm:$0x1]
      %v747 = vperm.slane %v745, 0
      %v749 = vmul.f32 %v743, %v747
      %v750 = vmul.f32 %v744, %v747
      %v751 = vsel %vm713, %v749, 0.0
      %752 = vadd.xlane.f32.xlu0 %v751
      %v753 = vpop.xlane.xlu0 %752
      %v754 = vsel %vm713, %v750, 0.0
      %755 = vadd.xlane.f32.xlu0 %v754
      %v756 = vpop.xlane.xlu0 %755
      %v757 = vld [vmem:[#allocation2] sm:$0x1]
      %v759 = vperm.slane %v757, 0
      %v761 = vadd.f32 %v753, %v759
      %v762 = vadd.f32 %v756, %v759
      %v763 = vld [vmem:[%s11] sm:$0xff]
      %v764 = vld [vmem:[%s11 + $0x8] sm:$0xff]
      %v765 = vld [vmem:[%s11 + $0x10] sm:$0xff]
      %v766 = vld [vmem:[%s11 + $0x18] sm:$0xff]
      %v767 = vld [vmem:[%s11 + $0x20] sm:$0xff]
      %v768 = vld [vmem:[%s11 + $0x28] sm:$0xff]
      %v769 = vld [vmem:[%s11 + $0x30] sm:$0xff]
      %v770 = vld [vmem:[%s11 + $0x38] sm:$0xff]
      %v771 = vld [vmem:[%s12] sm:$0x1]
      %v773 = vperm.slane %v771, 0
      %v776 = vsel %vm673, %v660, 0
      %778 = vmatpush.msra.mxu0 0.0
      %779 = vmatpush.msra.mxu0 0.0
      %780 = vmatpush.msra.mxu0 0.0
      %781 = vmatpush.msra.mxu0 0.0
      %782 = vmatpush.msra.mxu0 0.0
      %783 = vmatpush.msra.mxu0 0.0
      %784 = vmatpush.msra.mxu0 0.0
      %785 = vmatpush.msra.mxu0 0.0
      %786 = vmatpush.msra.mxu0 %v770
      %787 = vmatpush.msra.mxu0 %v769
      %788 = vmatpush.msra.mxu0 %v768
      %789 = vmatpush.msra.mxu0 %v767
      %790 = vmatpush.msra.mxu0 %v766
      %791 = vmatpush.msra.mxu0 %v765
      %792 = vmatpush.msra.mxu0 %v764
      %793 = vmatpush.msra.mxu0 %v763
      %794 = vmatmul.f32.gmra.mxu0 %v776
      %v795 = vpop.f32.mrf.mxu0
      %v796 = vadd.f32 %v773, %v795
      %797 = vmatmul.f32.gmra.mxu0 %v678
      %v798 = vpop.f32.mrf.mxu0
      %v799 = vadd.f32 %v773, %v798
      %800 = vdwg.mxu0
      %v801 = vmax.f32 %v796, 0.0
      %v802 = vmax.f32 %v799, 0.0
      %v803 = vld [vmem:[%s13] sm:$0xff]
      %v804 = vld [vmem:[%s13 + $0x8] sm:$0xff]
      %v805 = vld [vmem:[%s13 + $0x10] sm:$0xff]
      %v806 = vld [vmem:[%s13 + $0x18] sm:$0xff]
      %v807 = vld [vmem:[%s14] sm:$0x1]
      %v809 = vperm.slane %v807, 0
      %v812 = vsel %vm713, %v801, 0
      %v815 = vsel %vm713, %v802, 0
      %817 = vmatpush.msra.mxu0 0.0
      %818 = vmatpush.msra.mxu0 0.0
      %819 = vmatpush.msra.mxu0 0.0
      %820 = vmatpush.msra.mxu0 0.0
      %821 = vmatpush.msra.mxu0 0.0
      %822 = vmatpush.msra.mxu0 0.0
      %823 = vmatpush.msra.mxu0 0.0
      %824 = vmatpush.msra.mxu0 0.0
      %825 = vmatpush.msra.mxu0 0.0
      %826 = vmatpush.msra.mxu0 0.0
      %827 = vmatpush.msra.mxu0 0.0
      %828 = vmatpush.msra.mxu0 0.0
      %829 = vmatpush.msra.mxu0 %v806
      %830 = vmatpush.msra.mxu0 %v805
      %831 = vmatpush.msra.mxu0 %v804
      %832 = vmatpush.msra.mxu0 %v803
      %833 = vmatmul.f32.gmra.mxu0 %v812
      %v834 = vpop.f32.mrf.mxu0
      %v835 = vadd.f32 %v809, %v834
      %836 = vmatmul.f32.gmra.mxu0 %v815
      %v837 = vpop.f32.mrf.mxu0
      %v838 = vadd.f32 %v809, %v837
      %839 = vdwg.mxu0
      %v840 = vmax.f32 %v835, 0.0
      %v841 = vmax.f32 %v838, 0.0
      %v842 = vld [vmem:[%s15] sm:$0x1]
      %v844 = vperm.slane %v842, 0
      %v846 = vmul.f32 %v840, %v844
      %v847 = vmul.f32 %v841, %v844
      %v848 = vsel %vm713, %v846, 0.0
      %849 = vadd.xlane.f32.xlu0 %v848
      %v850 = vpop.xlane.xlu0 %849
      %v851 = vsel %vm713, %v847, 0.0
      %852 = vadd.xlane.f32.xlu0 %v851
      %v853 = vpop.xlane.xlu0 %852
      %v854 = vld [vmem:[#allocation3] sm:$0x1]
      %v856 = vperm.slane %v854, 0
      %v858 = vadd.f32 %v850, %v856
      %v859 = vadd.f32 %v853, %v856
      %vm860 = vcmask 7168
      %861 = vst.msk [vmem:[%s598] sm:$0xff] %vm860, %v761
      %863 = vrot.lane.b32.xlu0 %v858, 1
      %v864 = vpop.permute.xlu0 %863
      %vm866 = vcmask 15368
      %867 = vst.msk [vmem:[%s598] sm:$0xff] %vm866, %v864
      %869 = vrot.lane.b32.xlu0 %v762, 2
      %v870 = vpop.permute.xlu0 %869
      %vm872 = vcmask 23568
      %873 = vst.msk [vmem:[%s598] sm:$0xff] %vm872, %v870
      %875 = vrot.lane.b32.xlu0 %v859, 3
      %v876 = vpop.permute.xlu0 %875
      %vm878 = vcmask 31768
      %879 = vst.msk [vmem:[%s598] sm:$0xff] %vm878, %v876
      %p880 = scmp.lt.s32.totalorder %s32, 1
      %s881 = scalar_select %p880, %s32, 1
      %s882 = smul.addr %s881, 8
      %s883 = scalar_lea.vmem %s17, %s882
      // Predicated region
      $region89: #{tpu_custom_call.1} parent=87 // pred_check
        %p884 = pneg %p427
      $region90: #{tpu_custom_call.1} parent=87 // pred_check_branch
        %886 = sbr.rel (%p884) target = $region92
      $region91: #{tpu_custom_call.1} parent=87 // pred_region
        _
      $region92: #{tpu_custom_call.1} parent=87 // pred_fallthru
        _
    $region88: #{tpu_custom_call.1} parent=5 // pred_fallthru
      _
    %p887 = scmp.le.s32.totalorder 2, %s27
    // Predicated region
    $region93: #{tpu_custom_call.1} parent=5 // pred_check
      %p888 = pneg %p887
    $region94: #{tpu_custom_call.1} parent=5 // pred_check_branch
      %890 = sbr.rel (%p888) target = $region96
    $region95: #{tpu_custom_call.1} parent=5 // pred_region
      %s891 = ssub.s32 %s27, 2
      // Predicated region
      $region97: #{tpu_custom_call.1} parent=95 // pred_check
        %p892 = pneg %p433
      $region98: #{tpu_custom_call.1} parent=95 // pred_check_branch
        %894 = sbr.rel (%p892) target = $region100
      $region99: #{tpu_custom_call.1} parent=95 // pred_region
        %p895 = scmp.lt.s32.totalorder %s33, 1
        %s896 = scalar_select %p895, %s33, 1
        %s897 = smul.addr %s896, 8
        %s898 = scalar_lea.vmem %s17, %s897
      $region100: #{tpu_custom_call.1} parent=95 // pred_fallthru
        _
    $region96: #{tpu_custom_call.1} parent=5 // pred_fallthru
      _
  $region6: #{tpu_custom_call.1} parent=0 // loop_footer
    %s31 = sadd.s32 1, %s27
  $region7: #{tpu_custom_call.1} parent=0 // loop_footer_branch
    %26 = sbr.rel target = $region3
  $region8: #{tpu_custom_call.1} parent=0 // loop_exit
    _

</llo_original>
